<compile_context>
chip_gen: v5e
topology: v5e:2x2
jax: 0.10.0
libtpu: 0.0.40
codegen_flags: <defaults>
</compile_context>

<pallas_src>
import jax
import jax.numpy as jnp
import numpy as np
from jax.experimental import pallas as pl
from jax.experimental.pallas import tpu as pltpu


# ----------------------------- helpers -------------------------------------

def _divisor_tile(n, cap):
    """Largest divisor of n that is <= cap (>= 1)."""
    t = max(1, min(n, cap))
    while n % t:
        t -= 1
    return t


def _vmem_capacity_bytes():
    """Physical VMEM of the attached TPU generation (conservative fallback)."""
    try:
        cap = int(getattr(pltpu.get_tpu_info(), "vmem_capacity_bytes", 0))
        if cap > 0:
            return cap
    except Exception:
        pass
    return 64 * 1024 * 1024          # v7x-sized fallback


def _choose_tiles(N, H, W, Cin, Cout, dmax, vmem_cap,
                  row_cap=None, cin_chunk=None):
    """Pick (th, ck): VMEM-budgeted row tile and Cin chunk.

    128 MiB parts (v5e/v6e) get large row tiles so the weight set is streamed
    close to once per image; 64 MiB parts (v7x) get ck<=256 and a smaller th.
    Keeps at least two (n, row-tile) grid steps for 2-TensorCore chips.
    """
    if cin_chunk is None:
        cin_chunk = 512 if vmem_cap >= (96 << 20) else 256
    ck = _divisor_tile(Cin, cin_chunk)           # ck must divide Cin exactly
    Wp = W + 2 * dmax
    budget = int(vmem_cap * 0.65)
    fixed = (2 * 28 * ck * Cout * 2              # double-buffered packed weights
             + 2 * (2 * dmax) * Wp * ck * 2)     # halo rows of the input buffer
    per_row = (4 * W * Cout * 4                  # f32 branch accumulators
               + 2 * W * 5 * Cout * 2            # double-buffered bf16 out block
               + 2 * Wp * ck * 2)                # double-buffered input rows
    th = max(1, (budget - fixed) // per_row)
    if row_cap is not None:
        th = min(th, row_cap)
    th = min(th, 256)
    if th >= H:
        th = H
    elif th >= 8:
        th -= th % 8                             # sublane-friendly row count
    if N == 1 and th >= H and H > 1:
        th = -(-H // 2)                          # keep 2 row tiles for 2 TCs
    return th, ck


# ------------------------- Pallas kernel builders ---------------------------

def _make_pool_kernel(H, W, Cin, Cout, th):
    """Row-tiled global-average-pool -> 1x1 conv (BN folded) -> ReLU."""
    inv_hw = 1.0 / float(H * W)

    def kernel(x_ref, w4_ref, b4_ref, o_ref, acc_ref):
        rt = pl.program_id(1)

        @pl.when(rt == 0)
        def _init():
            acc_ref[...] = jnp.zeros_like(acc_ref)

        xs = x_ref[0].astype(jnp.float32).reshape(th * W, Cin)
        acc_ref[...] += jnp.sum(xs, axis=0, keepdims=True)          # (1, Cin)

        @pl.when(rt == pl.num_programs(1) - 1)
        def _finalize():
            pooled = acc_ref[...] * inv_hw                          # (1, Cin)
            y = jnp.dot(pooled, w4_ref[...],
                        preferred_element_type=jnp.float32)         # (1, Cout)
            o_ref[0] = jnp.maximum(y + b4_ref[...], 0.0)

    return kernel


def _make_aspp_kernel(W, Cout, th, ck, dmax, dil, n_kc):
    """Fused ASPP conv branches + concat for one (row-tile, Cin-chunk)."""
    hh = th + 2 * dmax            # halo'd row window height
    M = th * W

    def kernel(xp_hbm, w0_ref, w1_ref, w2_ref, w3_ref, b_ref, f4_ref,
               o_ref, xbuf, acc_ref, sem):
        n = pl.program_id(0)
        rt = pl.program_id(1)
        kc = pl.program_id(2)
        row0 = rt * th
        slot = kc & 1

        def start_fetch(chunk, s):
            pltpu.make_async_copy(
                xp_hbm.at[n, chunk, pl.ds(row0, hh)], xbuf.at[s],
                sem.at[s]).start()

        def wait_fetch(s):
            pltpu.make_async_copy(
                xp_hbm.at[n, 0, pl.ds(0, hh)], xbuf.at[s],
                sem.at[s]).wait()

        # Prime the pipeline at the start of every (n, rt) strip; for kc > 0
        # the current chunk was already prefetched by the previous grid step.
        @pl.when(kc == 0)
        def _prime():
            start_fetch(0, 0)

        # Prefetch the next Cin chunk while computing the current one.
        @pl.when(kc + 1 < n_kc)
        def _prefetch():
            start_fetch(kc + 1, 1 - slot)

        wait_fetch(slot)

        @pl.when(kc == 0)
        def _init():
            acc_ref[...] = jnp.zeros_like(acc_ref)

        def window(r0, cols):
            # Concatenate the kw-shifted (th, W, ck) views along K so one
            # matmul covers a whole kernel row (kw-major K matches the packed
            # weight layout).  r0/cols are static Python ints.
            parts = [xbuf[slot, r0:r0 + th, c0:c0 + W, :] for c0 in cols]
            w = parts[0] if len(parts) == 1 else jnp.concatenate(parts, axis=-1)
            return w.reshape(M, ck * len(parts))

        # branch 0: 1x1 conv (BN scale already folded into w0)
        acc_ref[0] += jnp.dot(window(dmax, (dmax,)), w0_ref[0],
                              preferred_element_type=jnp.float32)

        # branches 1..3: 3x3 dilated conv = 3 per-kh matmuls over (M, 3*ck)
        for bi, (w_ref, d) in enumerate(
                ((w1_ref, dil[0]), (w2_ref, dil[1]), (w3_ref, dil[2])), 1):
            cols = (dmax - d, dmax, dmax + d)
            for kh in range(3):
                acc_ref[bi] += jnp.dot(
                    window(dmax + (kh - 1) * d, cols), w_ref[0, kh],
                    preferred_element_type=jnp.float32)

        @pl.when(kc == n_kc - 1)
        def _finalize():
            # Write each branch straight into its channel slice (lane-dense
            # when Cout is a multiple of 128); no concatenate temporary.
            for i in range(4):
                y = jnp.maximum(acc_ref[i] + b_ref[i], 0.0)
                o_ref[0, :, :, i * Cout:(i + 1) * Cout] = (
                    y.reshape(th, W, Cout).astype(o_ref.dtype))
            # branch 4: pooled projection; bilinear upsampling of a 1x1 map
            # with align_corners=False is exactly a broadcast.
            f4 = f4_ref[0].astype(o_ref.dtype)                      # (1, Cout)
            o_ref[0, :, :, 4 * Cout:5 * Cout] = jnp.broadcast_to(
                f4, (th, W, Cout))

    return kernel


# ------------------------------- forward -----------------------------------

def aspp_forward(params, x_nchw, *, row_cap=None, cin_chunk=None):
    """ASPP forward: NCHW f32 in / NCHW f32 out; NHWC + bf16 matmuls inside."""
    N, Cin, H, W = x_nchw.shape
    Cout = params["w0"].shape[1]
    dil = tuple(params[f"d{i}"] for i in (1, 2, 3))
    dmax = max(dil)
    Wp = W + 2 * dmax

    # Generation-aware VMEM knobs.
    vmem_cap = _vmem_capacity_bytes()
    th, ck = _choose_tiles(N, H, W, Cin, Cout, dmax, vmem_cap,
                           row_cap=row_cap, cin_chunk=cin_chunk)
    n_kc = Cin // ck
    n_rt = -(-H // th)
    Ht = n_rt * th                       # padded row count (th need not divide H)
    thp = _divisor_tile(H, 16)           # pool branch row tile (decoupled)

    # Explicit scoped-VMEM limit (the default 16/32 MiB is too small once the
    # accumulators + double-buffered blocks grow).
    need_main = (2 * (th + 2 * dmax) * Wp * ck * 2      # 2-slot halo buffer
                 + 4 * th * W * Cout * 4                # f32 accumulators
                 + 2 * th * W * 5 * Cout * 2            # bf16 out block x2
                 + 2 * 28 * ck * Cout * 2               # packed weights x2
                 + (1 << 20))
    need_pool = 2 * thp * W * Cin * 2 + Cin * 4 + (1 << 20)
    vmem_limit = int(min(0.9 * vmem_cap,
                         max(32 << 20, 1.5 * max(need_main, need_pool)
                             + (8 << 20))))

    x_nhwc = jnp.transpose(x_nchw, (0, 2, 3, 1)).astype(jnp.bfloat16)

    # One zero-pad of the input: max-dilation halo on both spatial dims plus
    # (Ht - H) extra zero rows so the row tile is a free choice.  Reorganised
    # so the manual halo DMA only needs leading-dim indices:
    #   (N, n_kc, Ht + 2*dmax, Wp, ck)
    xp = jnp.pad(x_nhwc,
                 ((0, 0), (dmax, dmax + (Ht - H)), (dmax, dmax), (0, 0)))
    xp = xp.reshape(N, Ht + 2 * dmax, Wp, n_kc, ck).transpose(0, 3, 1, 2, 4)

    # Fold BN scale into conv weights (inference-mode affine); bias separate.
    # Pre-pack per Cin chunk into contiguous blocks so the per-chunk weight
    # DMA is a single dense transfer.
    # TODO(synk): PyTorch BatchNorm2d defaults to training-mode batch stats;
    # here BN is folded as inference-mode per-channel affine.
    s0, bb0 = params["bn0"]
    w0p = (params["w0"] * s0[None, :]).astype(jnp.bfloat16)
    w0p = w0p.reshape(n_kc, ck, Cout)
    wps, biases = [], [bb0]
    for i in (1, 2, 3):
        si, bbi = params[f"bn{i}"]
        w = (params[f"w{i}"] * si[None, None, None, :]).astype(jnp.bfloat16)
        # HWIO (3,3,Cin,Cout) -> (n_kc, 3, 3*ck, Cout), K index = kw*ck + c.
        w = w.reshape(3, 3, n_kc, ck, Cout).transpose(2, 0, 1, 3, 4)
        wps.append(w.reshape(n_kc, 3, 3 * ck, Cout))
        biases.append(bbi)
    bias03 = jnp.stack(biases, axis=0).reshape(4, 1, Cout).astype(jnp.float32)
    s4, bb4 = params["bn4"]
    w4 = (params["w4"] * s4[None, :]).astype(jnp.float32)     # tiny, keep f32
    b4 = bb4.reshape(1, Cout).astype(jnp.float32)

    # ---- pooled branch: tiled global-avg-pool + 1x1 conv + BN + ReLU ----
    f4 = pl.pallas_call(
        _make_pool_kernel(H, W, Cin, Cout, thp),
        out_shape=jax.ShapeDtypeStruct((N, 1, Cout), jnp.float32),
        grid=(N, H // thp),
        in_specs=[
            pl.BlockSpec((1, thp, W, Cin), lambda n, r: (n, r, 0, 0)),
            pl.BlockSpec((Cin, Cout), lambda n, r: (0, 0)),
            pl.BlockSpec((1, Cout), lambda n, r: (0, 0)),
        ],
        out_specs=pl.BlockSpec((1, 1, Cout), lambda n, r: (n, 0, 0)),
        scratch_shapes=[pltpu.VMEM((1, Cin), jnp.float32)],
        compiler_params=pltpu.CompilerParams(
            dimension_semantics=("parallel", "arbitrary"),
            vmem_limit_bytes=vmem_limit),
    )(x_nhwc, w4, b4)

    # ---- fused conv branches + concat: one kernel writes (th, W, 5*Cout) ----
    y = pl.pallas_call(
        _make_aspp_kernel(W, Cout, th, ck, dmax, dil, n_kc),
        out_shape=jax.ShapeDtypeStruct((N, Ht, W, 5 * Cout), jnp.bfloat16),
        grid=(N, n_rt, n_kc),
        in_specs=[
            pl.BlockSpec(memory_space=pl.ANY),                              # xp (HBM)
            pl.BlockSpec((1, ck, Cout), lambda n, r, k: (k, 0, 0)),         # w0
            pl.BlockSpec((1, 3, 3 * ck, Cout), lambda n, r, k: (k, 0, 0, 0)),   # w1
            pl.BlockSpec((1, 3, 3 * ck, Cout), lambda n, r, k: (k, 0, 0, 0)),   # w2
            pl.BlockSpec((1, 3, 3 * ck, Cout), lambda n, r, k: (k, 0, 0, 0)),   # w3
            pl.BlockSpec((4, 1, Cout), lambda n, r, k: (0, 0, 0)),          # biases
            pl.BlockSpec((1, 1, Cout), lambda n, r, k: (n, 0, 0)),          # feat4
        ],
        out_specs=pl.BlockSpec((1, th, W, 5 * Cout),
                               lambda n, r, k: (n, r, 0, 0)),
        scratch_shapes=[
            pltpu.VMEM((2, th + 2 * dmax, Wp, ck), jnp.bfloat16),  # 2-slot halo buf
            pltpu.VMEM((4, th * W, Cout), jnp.float32),            # branch accum
            pltpu.SemaphoreType.DMA((2,)),
        ],
        compiler_params=pltpu.CompilerParams(
            dimension_semantics=("parallel", "parallel", "arbitrary"),
            vmem_limit_bytes=vmem_limit),
    )(xp, w0p, wps[0], wps[1], wps[2], bias03, f4)

    if Ht != H:
        y = y[:, :H]
    return jnp.transpose(y, (0, 3, 1, 2)).astype(jnp.float32)     # NCHW f32


# -------------------------- parameter construction -------------------------

def init_aspp_params(key, in_channel, out_channel, dilation_rates):
    # Deterministic synthetic parameters (no checkpoint loading).
    keys = jax.random.split(key, 16)
    ki = iter(keys)

    def bn_params(k, c):
        k1, k2, k3, k4 = jax.random.split(k, 4)
        gamma = 1.0 + 0.1 * jax.random.normal(k1, (c,), jnp.float32)
        beta = 0.1 * jax.random.normal(k2, (c,), jnp.float32)
        mean = 0.1 * jax.random.normal(k3, (c,), jnp.float32)
        var = jnp.abs(jax.random.normal(k4, (c,), jnp.float32)) + 0.5
        scale = gamma / jnp.sqrt(var + 1e-5)
        bias = beta - mean * scale
        return scale, bias

    params = {}
    params["w0"] = 0.2 * jax.random.normal(
        next(ki), (in_channel, out_channel), jnp.float32)
    params["bn0"] = bn_params(next(ki), out_channel)
    for i, d in enumerate(dilation_rates, start=1):
        # Weights stored in HWIO layout (kh, kw, cin, cout).
        params[f"w{i}"] = 0.2 * jax.random.normal(
            next(ki), (3, 3, in_channel, out_channel), jnp.float32)
        params[f"bn{i}"] = bn_params(next(ki), out_channel)
        params[f"d{i}"] = int(d)
    params["w4"] = 0.2 * jax.random.normal(
        next(ki), (in_channel, out_channel), jnp.float32)
    params["bn4"] = bn_params(next(ki), out_channel)
    return params


# ------------------------- Pure-JAX reference check ------------------------

def aspp_reference(params, x_nchw):
    x = jnp.transpose(x_nchw, (0, 2, 3, 1)).astype(jnp.float32)
    N, H, W, Cin = x.shape
    Cout = params["w0"].shape[1]
    dn = ("NHWC", "HWIO", "NHWC")

    def bn_relu(y, sb):
        s, b = sb
        return jnp.maximum(y * s + b, 0.0)

    feats = [bn_relu(jnp.einsum("nhwc,co->nhwo", x, params["w0"]), params["bn0"])]
    for i in (1, 2, 3):
        d = params[f"d{i}"]
        y = jax.lax.conv_general_dilated(
            x, params[f"w{i}"], window_strides=(1, 1),
            padding=[(d, d), (d, d)], rhs_dilation=(d, d),
            dimension_numbers=dn)
        feats.append(bn_relu(y, params[f"bn{i}"]))
    pooled = jnp.mean(x, axis=(1, 2))
    f4 = bn_relu(pooled @ params["w4"], params["bn4"])
    feats.append(jnp.broadcast_to(f4[:, None, None, :], (N, H, W, Cout)))
    y = jnp.concatenate(feats, axis=-1)
    return jnp.transpose(y, (0, 3, 1, 2))


if __name__ == "__main__":
    key = jax.random.PRNGKey(0)
    kx, kp = jax.random.split(key)

    N, Cin, H, W = 2, 4, 16, 16
    Cout = 8
    dilation_rates = (1, 2, 3)

    x = jax.random.normal(kx, (N, Cin, H, W), jnp.float32)
    params = init_aspp_params(kp, Cin, Cout, dilation_rates)

    y = aspp_forward(params, x)
    y = jax.block_until_ready(y)

    assert y.shape == (N, 5 * Cout, H, W), y.shape
    y_ref = aspp_reference(params, x)
    np.testing.assert_allclose(np.asarray(y), np.asarray(y_ref),
                               rtol=3e-2, atol=5e-2)
    print("KERNEL_OK")
</pallas_src>

<mosaic_0001>
module attributes {stable_mosaic.version = 11 : i64} {
  func.func @kernel(%arg0: i32, %arg1: i32, %arg2: memref<1x16x16x4xbf16, #tpu.memory_space<vmem>>, %arg3: memref<4x8xf32, #tpu.memory_space<vmem>>, %arg4: memref<1x8xf32, #tpu.memory_space<vmem>>, %arg5: memref<1x1x8xf32, #tpu.memory_space<vmem>>, %arg6: memref<1x4xf32, #tpu.memory_space<vmem>>) attributes {dimension_semantics = [#tpu.dimension_semantics<parallel>, #tpu.dimension_semantics<arbitrary>], iteration_bounds = array<i64: 2, 1>, scalar_prefetch = 0 : i64, scratch_operands = 1 : i64, tpu.core_type = #tpu.core_type<tc>, window_params = [{transform_indices = @transform_0, window_bounds = array<i64: 1, 16, 16, 4>}, {pipeline_mode = #tpu.pipeline_mode<synchronous>, transform_indices = @transform_1, window_bounds = array<i64: 4, 8>}, {pipeline_mode = #tpu.pipeline_mode<synchronous>, transform_indices = @transform_2, window_bounds = array<i64: 1, 8>}, {transform_indices = @transform_3, window_bounds = array<i64: 1, 1, 8>}]} {
    %c0_i32 = arith.constant 0 : i32
    %0 = arith.cmpi eq, %arg1, %c0_i32 : i32
    %1 = arith.extui %0 : i1 to i32
    %c0_i32_0 = arith.constant 0 : i32
    %2 = arith.cmpi ne, %1, %c0_i32_0 : i32
    scf.if %2 {
      %cst_10 = arith.constant 0.000000e+00 : f32
      %15 = vector.broadcast %cst_10 : f32 to vector<1x4xf32>
      %c0_11 = arith.constant 0 : index
      %c0_12 = arith.constant 0 : index
      %16 = vector.load %arg6[%c0_11, %c0_12] : memref<1x4xf32, #tpu.memory_space<vmem>>, vector<1x4xf32>
      tpu.vector_store %arg6[%c0_11, %c0_12], %15 {strides = array<i32>} : memref<1x4xf32, #tpu.memory_space<vmem>>, vector<1x4xf32>,
    } else {
    }
    %c0 = arith.constant 0 : index
    %c0_1 = arith.constant 0 : index
    %c0_2 = arith.constant 0 : index
    %c0_3 = arith.constant 0 : index
    %3 = vector.load %arg2[%c0, %c0_1, %c0_2, %c0_3] : memref<1x16x16x4xbf16, #tpu.memory_space<vmem>>, vector<1x16x16x4xbf16>
    %4 = vector.shape_cast %3 : vector<1x16x16x4xbf16> to vector<16x16x4xbf16>
    %5 = arith.extf %4 : vector<16x16x4xbf16> to vector<16x16x4xf32>
    %6 = vector.shape_cast %5 : vector<16x16x4xf32> to vector<256x4xf32>
    %c0_4 = arith.constant 0 : index
    %c0_5 = arith.constant 0 : index
    %7 = vector.load %arg6[%c0_4, %c0_5] : memref<1x4xf32, #tpu.memory_space<vmem>>, vector<1x4xf32>
    %cst = arith.constant dense<0.000000e+00> : vector<4xf32>
    %8 = vector.multi_reduction <add>, %6, %cst [0] : vector<256x4xf32> to vector<4xf32>
    %9 = vector.shape_cast %8 : vector<4xf32> to vector<1x4xf32>
    %10 = arith.addf %7, %9 : vector<1x4xf32>
    %c0_6 = arith.constant 0 : index
    %c0_7 = arith.constant 0 : index
    %11 = vector.load %arg6[%c0_6, %c0_7] : memref<1x4xf32, #tpu.memory_space<vmem>>, vector<1x4xf32>
    tpu.vector_store %arg6[%c0_6, %c0_7], %10 {strides = array<i32>} : memref<1x4xf32, #tpu.memory_space<vmem>>, vector<1x4xf32>,
    %c0_i32_8 = arith.constant 0 : i32
    %12 = arith.cmpi eq, %arg1, %c0_i32_8 : i32
    %13 = arith.extui %12 : i1 to i32
    %c0_i32_9 = arith.constant 0 : i32
    %14 = arith.cmpi ne, %13, %c0_i32_9 : i32
    scf.if %14 {
      %c0_10 = arith.constant 0 : index
      %c0_11 = arith.constant 0 : index
      %15 = vector.load %arg6[%c0_10, %c0_11] : memref<1x4xf32, #tpu.memory_space<vmem>>, vector<1x4xf32>
      %cst_12 = arith.constant 3.906250e-03 : f32
      %16 = vector.broadcast %cst_12 : f32 to vector<1x4xf32>
      %17 = arith.mulf %15, %16 : vector<1x4xf32>
      %c0_13 = arith.constant 0 : index
      %c0_14 = arith.constant 0 : index
      %18 = vector.load %arg3[%c0_13, %c0_14] : memref<4x8xf32, #tpu.memory_space<vmem>>, vector<4x8xf32>
      %cst_15 = arith.constant dense<0.000000e+00> : vector<1x8xf32>
      %19 = tpu.matmul %17, %18, %cst_15 {dimension_numbers = #tpu.dot_dimension_numbers<[1], [0], [0], [1], [0, 0, 1, 1], [], []>} : vector<1x4xf32>, vector<4x8xf32>, vector<1x8xf32> -> vector<1x8xf32>
      %c0_16 = arith.constant 0 : index
      %c0_17 = arith.constant 0 : index
      %20 = vector.load %arg4[%c0_16, %c0_17] : memref<1x8xf32, #tpu.memory_space<vmem>>, vector<1x8xf32>
      %21 = arith.addf %19, %20 : vector<1x8xf32>
      %cst_18 = arith.constant 0.000000e+00 : f32
      %22 = vector.broadcast %cst_18 : f32 to vector<1x8xf32>
      %23 = arith.maximumf %21, %22 : vector<1x8xf32>
      %c0_19 = arith.constant 0 : index
      %c0_20 = arith.constant 0 : index
      %c0_21 = arith.constant 0 : index
      %24 = vector.load %arg5[%c0_19, %c0_20, %c0_21] : memref<1x1x8xf32, #tpu.memory_space<vmem>>, vector<1x1x8xf32>
      %25 = vector.shape_cast %24 : vector<1x1x8xf32> to vector<1x8xf32>
      %26 = vector.shape_cast %23 : vector<1x8xf32> to vector<1x1x8xf32>
      tpu.vector_store %arg5[%c0_19, %c0_20, %c0_21], %26 {strides = array<i32>} : memref<1x1x8xf32, #tpu.memory_space<vmem>>, vector<1x1x8xf32>,
    } else {
    }
    return
  }
  func.func @transform_0(%arg0: i32, %arg1: i32) -> (i32, i32, i32, i32) {
    %c0_i32 = arith.constant 0 : i32
    %c0_i32_0 = arith.constant 0 : i32
    %c0_i32_1 = arith.constant 0 : i32
    return %arg0, %arg1, %c0_i32, %c0_i32_0 : i32, i32, i32, i32
  }
  func.func @transform_1(%arg0: i32, %arg1: i32) -> (i32, i32) {
    %c0_i32 = arith.constant 0 : i32
    %c0_i32_0 = arith.constant 0 : i32
    %c0_i32_1 = arith.constant 0 : i32
    return %c0_i32, %c0_i32_0 : i32, i32
  }
  func.func @transform_2(%arg0: i32, %arg1: i32) -> (i32, i32) {
    %c0_i32 = arith.constant 0 : i32
    %c0_i32_0 = arith.constant 0 : i32
    %c0_i32_1 = arith.constant 0 : i32
    return %c0_i32, %c0_i32_0 : i32, i32
  }
  func.func @transform_3(%arg0: i32, %arg1: i32) -> (i32, i32, i32) {
    %c0_i32 = arith.constant 0 : i32
    %c0_i32_0 = arith.constant 0 : i32
    %c0_i32_1 = arith.constant 0 : i32
    return %arg0, %c0_i32, %c0_i32_0 : i32, i32, i32
  }
}

</mosaic_0001>

<llo_original>
// kernel: tpu_custom_call.1
$region0: #{tpu_custom_call.1}
  #allocation0 [shape = 'u32[]', space=smem, size = 0x4, offset = 0x4, fixed_abs, tag = 'smem constant byte address 0x4 - core index']
  #allocation1 [shape = 'u32[72,128]{1,0:T(1,128)}', space=vmem, size = 0x9000, scoped, tag = 'internal scratch']
  #allocation2 [shape = 'f32[1,4]{1,0:T(1,128)}', space=vmem, size = 0x200, scoped, tag = 'scratch operand']
  %s0 = inlined_call_operand.vmem [shape: bf16[2,16,16,4], index: 0, kind: input, shape index: {}]
  %s1 = inlined_call_operand.vmem [shape: f32[4,8], index: 1, kind: input, shape index: {}]
  %s2 = inlined_call_operand.vmem [shape: f32[1,8], index: 2, kind: input, shape index: {}]
  %s3 = inlined_call_operand.hbm [shape: f32[2,1,8], index: 3, kind: output, shape index: {}]
  %s4 = sld [smem:[#allocation0]]
  $region53: #{tpu_custom_call.1} parent=0
    _
  %s6 = ssub.s32 1, %s4
  %s7 = scalar_select 0, %s6, %s4
  $region1: #{tpu_custom_call.1} parent=0
    #allocation3 [shape = 'u8[1024]{0}', space=vmem, size = 0x400, scoped, tag = 'output window, operand 0']
    #allocation4 [shape = 's32[2]{0}', space=sflag, size = 0x8, scoped, tag = 'scoped memory for tpu_custom_call.1']
    %8 = vsyncpa [#allocation4], 0
    %s9 = scalar_lea.sflag [#allocation4], 1
    %10 = vsyncpa %s9, 0
    loop: start=0, step=1, limit=4
    $region2: #{tpu_custom_call.1} parent=1 // loop_pre_header
      _
    $region3: #{tpu_custom_call.1} parent=1 // loop_header
      %s12 = sphi 0, %s16
      %p13 = scmp.ge.s32.totalorder %s12, 4
      %s19 = sphi 0, %s31
      %s20 = sphi 0, %s27
      %s21 = sphi 0, %s19
      %s22 = sphi 0, %s20
      %s23 = sphi 0, %s21
      %s24 = sphi 0, %s22
      %s36 = sphi 0, %s38
      %s39 = sphi 0, %s36
      %s40 = sphi 0, %s39
      %s56 = sphi 0, %s40
      %s60 = sphi 0, %s60
      %s62 = sphi 0, %s60
      %s63 = sphi 0, %s62
      %s77 = sphi 0, %s63
      %s81 = sphi 0, %s81
      %s83 = sphi 0, %s81
      %s84 = sphi 0, %s83
      %s98 = sphi 0, %s84
      %s104 = sphi 0, %s106
      %s107 = sphi 0, %s104
      %s108 = sphi 0, %s107
      %s124 = sphi 0, %s108
    $region4: #{tpu_custom_call.1} parent=1 // loop_header_branch
      %15 = sbr.rel (%p13) target = $region8
    $region5: #{tpu_custom_call.1} parent=1 // loop_body
      %s17 = ssub.s32 %s12, 1
      %s18 = ssub.s32 %s12, 2
      %s25 = sadd.s32 1, %s20
      %p26 = scmp.ge.s32.totalorder %s25, 1
      %s27 = scalar_select %p26, 0, %s25
      %s28 = sadd.s32 1, %s19
      %s29 = scalar_select %p26, %s28, %s19
      %p30 = scmp.ge.s32.totalorder %s29, 2
      %s31 = scalar_select %p30, 0, %s29
      %s32 = ssub.s32 %s19, %s31
      %s33 = ssub.s32 %s20, %s27
      %s34 = sor.u32 %s32, %s33
      %p35 = scmp.eq.s32.totalorder %s34, 0
      %s37 = sadd.s32 %s36, 1
      %s38 = scalar_select %p35, %s36, %s37
      %p41 = pneg %p35
      %p42 = scmp.eq.s32.totalorder %s12, 1
      %p43 = por %p41, %p42
      %p44 = scmp.ne.s32.totalorder %s36, %s39
      %p45 = scmp.eq.s32.totalorder %s12, 0
      %p46 = por %p44, %p45
      %p47 = scmp.ne.s32.totalorder %s36, %s39
      %p48 = scmp.eq.s32.totalorder %s17, 1
      %p49 = por %p47, %p48
      %p50 = scmp.ne.s32.totalorder %s39, %s40
      %p51 = scmp.eq.s32.totalorder %s17, 0
      %p52 = por %p50, %p51
      %p53 = scmp.ne.s32.totalorder %s39, %s40
      %p54 = scmp.eq.s32.totalorder %s18, 1
      %p55 = por %p53, %p54
      %p57 = scmp.ne.s32.totalorder %s40, %s56
      %p58 = scmp.eq.s32.totalorder %s18, 0
      %p59 = por %p57, %p58
      %s61 = sadd.s32 %s60, 1
      %p64 = scmp.eq.s32.totalorder %s12, 1
      %p65 = scmp.ne.s32.totalorder %s60, %s62
      %p66 = scmp.eq.s32.totalorder %s12, 0
      %p67 = por %p65, %p66
      %p68 = scmp.ne.s32.totalorder %s60, %s62
      %p69 = scmp.eq.s32.totalorder %s17, 1
      %p70 = por %p68, %p69
      %p71 = scmp.ne.s32.totalorder %s62, %s63
      %p72 = scmp.eq.s32.totalorder %s17, 0
      %p73 = por %p71, %p72
      %p74 = scmp.ne.s32.totalorder %s62, %s63
      %p75 = scmp.eq.s32.totalorder %s18, 1
      %p76 = por %p74, %p75
      %p78 = scmp.ne.s32.totalorder %s63, %s77
      %p79 = scmp.eq.s32.totalorder %s18, 0
      %p80 = por %p78, %p79
      %s82 = sadd.s32 %s81, 1
      %p85 = scmp.eq.s32.totalorder %s12, 1
      %p86 = scmp.ne.s32.totalorder %s81, %s83
      %p87 = scmp.eq.s32.totalorder %s12, 0
      %p88 = por %p86, %p87
      %p89 = scmp.ne.s32.totalorder %s81, %s83
      %p90 = scmp.eq.s32.totalorder %s17, 1
      %p91 = por %p89, %p90
      %p92 = scmp.ne.s32.totalorder %s83, %s84
      %p93 = scmp.eq.s32.totalorder %s17, 0
      %p94 = por %p92, %p93
      %p95 = scmp.ne.s32.totalorder %s83, %s84
      %p96 = scmp.eq.s32.totalorder %s18, 1
      %p97 = por %p95, %p96
      %p99 = scmp.ne.s32.totalorder %s84, %s98
      %p100 = scmp.eq.s32.totalorder %s18, 0
      %p101 = por %p99, %p100
      %s102 = ssub.s32 %s19, %s31
      %p103 = scmp.eq.s32.totalorder %s102, 0
      %s105 = sadd.s32 %s104, 1
      %s106 = scalar_select %p103, %s104, %s105
      %p109 = pneg %p103
      %p110 = scmp.eq.s32.totalorder %s12, 1
      %p111 = por %p109, %p110
      %p112 = scmp.ne.s32.totalorder %s104, %s107
      %p113 = scmp.eq.s32.totalorder %s12, 0
      %p114 = por %p112, %p113
      %p115 = scmp.ne.s32.totalorder %s104, %s107
      %p116 = scmp.eq.s32.totalorder %s17, 1
      %p117 = por %p115, %p116
      %p118 = scmp.ne.s32.totalorder %s107, %s108
      %p119 = scmp.eq.s32.totalorder %s17, 0
      %p120 = por %p118, %p119
      %p121 = scmp.ne.s32.totalorder %s107, %s108
      %p122 = scmp.eq.s32.totalorder %s18, 1
      %p123 = por %p121, %p122
      %p125 = scmp.ne.s32.totalorder %s108, %s124
      %p126 = scmp.eq.s32.totalorder %s18, 0
      %p127 = por %p125, %p126
      %p128 = scmp.le.s32.totalorder 1, %s12
      %p129 = scmp.lt.s32.totalorder %s12, 3
      %p130 = pnand %p128, %p129
      %p131 = pneg %p130
      // Predicated region
      $region9: #{tpu_custom_call.1} parent=5 // pred_check
        _
      $region10: #{tpu_custom_call.1} parent=5 // pred_check_branch
        %133 = sbr.rel (%p130) target = $region12
      $region11: #{tpu_custom_call.1} parent=5 // pred_region
        %s134 = ssub.s32 %s12, 1
        // Predicated region
        $region13: #{tpu_custom_call.1} parent=11 // pred_check
          %p135 = pneg %p73
        $region14: #{tpu_custom_call.1} parent=11 // pred_check_branch
          %137 = sbr.rel (%p135) target = $region16
        $region15: #{tpu_custom_call.1} parent=11 // pred_region
          _
        $region16: #{tpu_custom_call.1} parent=11 // pred_fallthru
          _
        // Predicated region
        $region17: #{tpu_custom_call.1} parent=11 // pred_check
          %p138 = pneg %p94
        $region18: #{tpu_custom_call.1} parent=11 // pred_check_branch
          %140 = sbr.rel (%p138) target = $region20
        $region19: #{tpu_custom_call.1} parent=11 // pred_region
          _
        $region20: #{tpu_custom_call.1} parent=11 // pred_fallthru
          _
      $region12: #{tpu_custom_call.1} parent=5 // pred_fallthru
        _
      %p141 = scmp.lt.s32.totalorder %s12, 2
      // Predicated region
      $region21: #{tpu_custom_call.1} parent=5 // pred_check
        %p142 = pneg %p141
      $region22: #{tpu_custom_call.1} parent=5 // pred_check_branch
        %144 = sbr.rel (%p142) target = $region24
      $region23: #{tpu_custom_call.1} parent=5 // pred_region
        // Predicated region
        $region25: #{tpu_custom_call.1} parent=23 // pred_check
          %p145 = pneg %p46
        $region26: #{tpu_custom_call.1} parent=23 // pred_check_branch
          %147 = sbr.rel (%p145) target = $region28
        $region27: #{tpu_custom_call.1} parent=23 // pred_region
          %s148 = smul.u32 16, %s20
          %p149 = scmp.lt.s32.totalorder %s19, 1
          %s150 = scalar_select %p149, %s19, 1
          %p151 = scmp.lt.s32.totalorder %s148, 15
          %s152 = scalar_select %p151, %s148, 15
          %s153 = smul.addr %s152, 2
          %s154 = smul.addr %s150, 32
          %s155 = sadd.s32 %s153, %s154
          %s156 = smul.addr %s155, 4
          %s157 = scalar_lea.vmem %s0, %s156
          %s158 = smul.u32 16, %s20
        $region28: #{tpu_custom_call.1} parent=23 // pred_fallthru
          _
      $region24: #{tpu_custom_call.1} parent=5 // pred_fallthru
        _
      %p159 = scmp.le.s32.totalorder 1, %s12
      %p160 = scmp.lt.s32.totalorder %s12, 3
      %p161 = pnand %p159, %p160
      %p162 = pneg %p161
      // Predicated region
      $region29: #{tpu_custom_call.1} parent=5 // pred_check
        _
      $region30: #{tpu_custom_call.1} parent=5 // pred_check_branch
        %164 = sbr.rel (%p161) target = $region32
      $region31: #{tpu_custom_call.1} parent=5 // pred_region
        %s165 = ssub.s32 %s12, 1
        %s166 = smul.u32 16, %s22
        %p167 = scmp.lt.s32.totalorder %s21, 1
        %s168 = scalar_select %p167, %s21, 1
        %p169 = scmp.lt.s32.totalorder %s166, 15
        %s170 = scalar_select %p169, %s166, 15
        %s171 = smul.addr %s170, 2
        %s172 = smul.addr %s168, 32
        %s173 = sadd.s32 %s171, %s172
        %s174 = smul.addr %s173, 4
        %s175 = scalar_lea.vmem %s0, %s174
        %p176 = pneg %p52
        %p177 = pneg %p49
        %p178 = pneg %p73
        %p179 = pneg %p70
        %p180 = pneg %p94
        %p181 = pneg %p91
        %p182 = pneg %p120
        %p183 = pneg %p117
        %s184 = sand.u32 %s107, 1
        %s185 = scalar_lea.sflag [#allocation4], %s184
        %s186 = sand.u32 %s107, 1
        %s187 = scalar_lea.vmem [#allocation3], %s186
        %s188 = smul.u32 16, %s22
        %p189 = scmp.lt.s32.totalorder %s21, 1
        %s190 = scalar_select %p189, %s21, 1
        %p191 = scmp.lt.s32.totalorder %s188, 15
        %s192 = scalar_select %p191, %s188, 15
        %s193 = smul.addr %s192, 2
        %s194 = smul.addr %s190, 32
        %s195 = sadd.s32 %s193, %s194
        %s196 = smul.addr %s195, 4
        %s197 = scalar_lea.vmem %s0, %s196
        %s198 = smul.u32 16, %s22
        %p199 = scmp.eq.s32.totalorder %s22, 0
        // Predicated region
        $region33: #{tpu_custom_call.1} parent=31 // pred_check
          %p200 = pneg %p199
        $region34: #{tpu_custom_call.1} parent=31 // pred_check_branch
          %202 = sbr.rel (%p200) target = $region36
        $region35: #{tpu_custom_call.1} parent=31 // pred_region
          %vm203 = vcmask 24576
          %204 = vst.msk [vmem:[#allocation2] sm:$0x1] %vm203, 0.0
        $region36: #{tpu_custom_call.1} parent=31 // pred_fallthru
          _
        %v205 = vld [vmem:[%s197] sm:$0xf]
        %v206 = vld [vmem:[%s197 + $0x4] sm:$0xf]
        %v207 = vld [vmem:[%s197 + $0x8] sm:$0xf]
        %v208 = vld [vmem:[%s197 + $0xc] sm:$0xf]
        %v209 = vld [vmem:[%s197 + $0x10] sm:$0xf]
        %v210 = vld [vmem:[%s197 + $0x14] sm:$0xf]
        %v211 = vld [vmem:[%s197 + $0x18] sm:$0xf]
        %v212 = vld [vmem:[%s197 + $0x1c] sm:$0xf]
        %v213 = vld [vmem:[%s197 + $0x20] sm:$0xf]
        %v214 = vld [vmem:[%s197 + $0x24] sm:$0xf]
        %v215 = vld [vmem:[%s197 + $0x28] sm:$0xf]
        %v216 = vld [vmem:[%s197 + $0x2c] sm:$0xf]
        %v217 = vld [vmem:[%s197 + $0x30] sm:$0xf]
        %v218 = vld [vmem:[%s197 + $0x34] sm:$0xf]
        %v219 = vld [vmem:[%s197 + $0x38] sm:$0xf]
        %v220 = vld [vmem:[%s197 + $0x3c] sm:$0xf]
        %v221 = vld [vmem:[%s197 + $0x40] sm:$0xf]
        %v222 = vld [vmem:[%s197 + $0x44] sm:$0xf]
        %v223 = vld [vmem:[%s197 + $0x48] sm:$0xf]
        %v224 = vld [vmem:[%s197 + $0x4c] sm:$0xf]
        %v225 = vld [vmem:[%s197 + $0x50] sm:$0xf]
        %v226 = vld [vmem:[%s197 + $0x54] sm:$0xf]
        %v227 = vld [vmem:[%s197 + $0x58] sm:$0xf]
        %v228 = vld [vmem:[%s197 + $0x5c] sm:$0xf]
        %v229 = vld [vmem:[%s197 + $0x60] sm:$0xf]
        %v230 = vld [vmem:[%s197 + $0x64] sm:$0xf]
        %v231 = vld [vmem:[%s197 + $0x68] sm:$0xf]
        %v232 = vld [vmem:[%s197 + $0x6c] sm:$0xf]
        %v233 = vld [vmem:[%s197 + $0x70] sm:$0xf]
        %v234 = vld [vmem:[%s197 + $0x74] sm:$0xf]
        %v235 = vld [vmem:[%s197 + $0x78] sm:$0xf]
        %v236 = vld [vmem:[%s197 + $0x7c] sm:$0xf]
        %v237 = vunpack.c.l.bf16 %v205
        %v238 = vunpack.c.l.bf16 %v206
        %v239 = vunpack.c.l.bf16 %v207
        %v240 = vunpack.c.l.bf16 %v208
        %v241 = vunpack.c.l.bf16 %v209
        %v242 = vunpack.c.l.bf16 %v210
        %v243 = vunpack.c.l.bf16 %v211
        %v244 = vunpack.c.l.bf16 %v212
        %v245 = vunpack.c.l.bf16 %v213
        %v246 = vunpack.c.l.bf16 %v214
        %v247 = vunpack.c.l.bf16 %v215
        %v248 = vunpack.c.l.bf16 %v216
        %v249 = vunpack.c.l.bf16 %v217
        %v250 = vunpack.c.l.bf16 %v218
        %v251 = vunpack.c.l.bf16 %v219
        %v252 = vunpack.c.l.bf16 %v220
        %v253 = vunpack.c.l.bf16 %v221
        %v254 = vunpack.c.l.bf16 %v222
        %v255 = vunpack.c.l.bf16 %v223
        %v256 = vunpack.c.l.bf16 %v224
        %v257 = vunpack.c.l.bf16 %v225
        %v258 = vunpack.c.l.bf16 %v226
        %v259 = vunpack.c.l.bf16 %v227
        %v260 = vunpack.c.l.bf16 %v228
        %v261 = vunpack.c.l.bf16 %v229
        %v262 = vunpack.c.l.bf16 %v230
        %v263 = vunpack.c.l.bf16 %v231
        %v264 = vunpack.c.l.bf16 %v232
        %v265 = vunpack.c.l.bf16 %v233
        %v266 = vunpack.c.l.bf16 %v234
        %v267 = vunpack.c.l.bf16 %v235
        %v268 = vunpack.c.l.bf16 %v236
        %v269 = vld [vmem:[#allocation2] sm:$0x1]
        %vm270 = vcmask 31744
        %v271 = vsel %vm270, %v237, 0.0
        %v272 = vsel %vm270, %v238, 0.0
        %v273 = vadd.f32 %v271, %v272
        %v274 = vsel %vm270, %v239, 0.0
        %v275 = vadd.f32 %v273, %v274
        %v276 = vsel %vm270, %v240, 0.0
        %v277 = vadd.f32 %v275, %v276
        %v278 = vsel %vm270, %v241, 0.0
        %v279 = vadd.f32 %v277, %v278
        %v280 = vsel %vm270, %v242, 0.0
        %v281 = vadd.f32 %v279, %v280
        %v282 = vsel %vm270, %v243, 0.0
        %v283 = vadd.f32 %v281, %v282
        %v284 = vsel %vm270, %v244, 0.0
        %v285 = vadd.f32 %v283, %v284
        %v286 = vsel %vm270, %v245, 0.0
        %v287 = vadd.f32 %v285, %v286
        %v288 = vsel %vm270, %v246, 0.0
        %v289 = vadd.f32 %v287, %v288
        %v290 = vsel %vm270, %v247, 0.0
        %v291 = vadd.f32 %v289, %v290
        %v292 = vsel %vm270, %v248, 0.0
        %v293 = vadd.f32 %v291, %v292
        %v294 = vsel %vm270, %v249, 0.0
        %v295 = vadd.f32 %v293, %v294
        %v296 = vsel %vm270, %v250, 0.0
        %v297 = vadd.f32 %v295, %v296
        %v298 = vsel %vm270, %v251, 0.0
        %v299 = vadd.f32 %v297, %v298
        %v300 = vsel %vm270, %v252, 0.0
        %v301 = vadd.f32 %v299, %v300
        %v302 = vsel %vm270, %v253, 0.0
        %v303 = vadd.f32 %v301, %v302
        %v304 = vsel %vm270, %v254, 0.0
        %v305 = vadd.f32 %v303, %v304
        %v306 = vsel %vm270, %v255, 0.0
        %v307 = vadd.f32 %v305, %v306
        %v308 = vsel %vm270, %v256, 0.0
        %v309 = vadd.f32 %v307, %v308
        %v310 = vsel %vm270, %v257, 0.0
        %v311 = vadd.f32 %v309, %v310
        %v312 = vsel %vm270, %v258, 0.0
        %v313 = vadd.f32 %v311, %v312
        %v314 = vsel %vm270, %v259, 0.0
        %v315 = vadd.f32 %v313, %v314
        %v316 = vsel %vm270, %v260, 0.0
        %v317 = vadd.f32 %v315, %v316
        %v318 = vsel %vm270, %v261, 0.0
        %v319 = vadd.f32 %v317, %v318
        %v320 = vsel %vm270, %v262, 0.0
        %v321 = vadd.f32 %v319, %v320
        %v322 = vsel %vm270, %v263, 0.0
        %v323 = vadd.f32 %v321, %v322
        %v324 = vsel %vm270, %v264, 0.0
        %v325 = vadd.f32 %v323, %v324
        %v326 = vsel %vm270, %v265, 0.0
        %v327 = vadd.f32 %v325, %v326
        %v328 = vsel %vm270, %v266, 0.0
        %v329 = vadd.f32 %v327, %v328
        %v330 = vsel %vm270, %v267, 0.0
        %v331 = vadd.f32 %v329, %v330
        %v332 = vsel %vm270, %v268, 0.0
        %v333 = vadd.f32 %v331, %v332
        %v334 = vrot.slane %v333, 4
        %v335 = vadd.f32 %v333, %v334
        %v336 = vrot.slane %v335, 2
        %v337 = vadd.f32 %v335, %v336
        %v338 = vrot.slane %v337, 1
        %v339 = vadd.f32 %v337, %v338
        %v340 = vadd.f32 %v269, %v339
        %vm341 = vcmask 24576
        %342 = vst.msk [vmem:[#allocation2] sm:$0x1] %vm341, %v340
        // Predicated region
        $region37: #{tpu_custom_call.1} parent=31 // pred_check
          %p343 = pneg %p199
        $region38: #{tpu_custom_call.1} parent=31 // pred_check_branch
          %345 = sbr.rel (%p343) target = $region40
        $region39: #{tpu_custom_call.1} parent=31 // pred_region
          %v346 = vld [vmem:[#allocation2] sm:$0x1]
          %v347 = vmul.f32 %v346, 0.00390625
          %v348 = vld [vmem:[%s1] sm:$0xf]
          %v349 = vld [vmem:[%s2] sm:$0x1]
          %v351 = vsel %vm270, %v347, 0
          %vm353 = vcmask 1043456
          %v355 = vsel %vm353, %v348, 0
          %357 = vmatpush.msra.mxu0 0.0
          %358 = vmatpush.msra.mxu0 0.0
          %359 = vmatpush.msra.mxu0 0.0
          %360 = vmatpush.msra.mxu0 0.0
          %361 = vmatpush.msra.mxu0 0.0
          %362 = vmatpush.msra.mxu0 0.0
          %363 = vmatpush.msra.mxu0 0.0
          %364 = vmatpush.msra.mxu0 0.0
          %365 = vmatpush.msra.mxu0 0.0
          %366 = vmatpush.msra.mxu0 0.0
          %367 = vmatpush.msra.mxu0 0.0
          %368 = vmatpush.msra.mxu0 0.0
          %369 = vmatpush.msra.mxu0 0.0
          %370 = vmatpush.msra.mxu0 0.0
          %371 = vmatpush.msra.mxu0 0.0
          %372 = vmatpush.msra.mxu0 %v355
          %373 = vmatmul.f32.gmra.mxu0 %v351
          %v374 = vpop.f32.mrf.mxu0
          %v375 = vadd.f32 %v349, %v374
          %376 = vdwg.mxu0
          %v377 = vmax.f32 %v375, 0.0
          %vm378 = vcmask 57344
          %379 = vst.msk [vmem:[%s187] sm:$0x1] %vm378, %v377
        $region40: #{tpu_custom_call.1} parent=31 // pred_fallthru
          _
        %s380 = sand.u32 %s107, 1
        %s381 = scalar_lea.sflag [#allocation4], %s380
        %s382 = sand.u32 %s107, 1
        %s383 = scalar_lea.vmem [#allocation3], %s382
        // Predicated region
        $region41: #{tpu_custom_call.1} parent=31 // pred_check
          %p384 = pneg %p117
        $region42: #{tpu_custom_call.1} parent=31 // pred_check_branch
          %386 = sbr.rel (%p384) target = $region44
        $region43: #{tpu_custom_call.1} parent=31 // pred_region
          %388 = vsyncadd %s381, 0
          %s389 = scalar_lea.hbm %s3, %s21
          %s391 = sshll.u32 %s383, 4
          %s392 = int_to_ptr.vmem [resolvable:$true] %s391
          %s393 = sshll.u32 %s389, 4
          %s394 = int_to_ptr.hbm [resolvable:$true] %s393
          %396 = dma.vmem_to_hbm [thread:$0]  %s392, 16, %s394, %s381
        $region44: #{tpu_custom_call.1} parent=31 // pred_fallthru
          _
      $region32: #{tpu_custom_call.1} parent=5 // pred_fallthru
        _
      %p397 = scmp.le.s32.totalorder 2, %s12
      // Predicated region
      $region45: #{tpu_custom_call.1} parent=5 // pred_check
        %p398 = pneg %p397
      $region46: #{tpu_custom_call.1} parent=5 // pred_check_branch
        %400 = sbr.rel (%p398) target = $region48
      $region47: #{tpu_custom_call.1} parent=5 // pred_region
        %s401 = ssub.s32 %s12, 2
        // Predicated region
        $region49: #{tpu_custom_call.1} parent=47 // pred_check
          %p402 = pneg %p123
        $region50: #{tpu_custom_call.1} parent=47 // pred_check_branch
          %404 = sbr.rel (%p402) target = $region52
        $region51: #{tpu_custom_call.1} parent=47 // pred_region
          %s405 = sand.u32 %s108, 1
          %s406 = scalar_lea.sflag [#allocation4], %s405
          %s407 = sand.u32 %s108, 1
          %s408 = scalar_lea.vmem [#allocation3], %s407
          %410 = dma.done %s406, 16
        $region52: #{tpu_custom_call.1} parent=47 // pred_fallthru
          _
      $region48: #{tpu_custom_call.1} parent=5 // pred_fallthru
        _
    $region6: #{tpu_custom_call.1} parent=1 // loop_footer
      %s16 = sadd.s32 1, %s12
    $region7: #{tpu_custom_call.1} parent=1 // loop_footer_branch
      %11 = sbr.rel target = $region3
    $region8: #{tpu_custom_call.1} parent=1 // loop_exit
      _
    %411 = vsyncpa [#allocation4], 1
    %s412 = scalar_lea.sflag [#allocation4], 1
    %413 = vsyncpa %s412, 1

</llo_original>
